<compile_context>
chip_gen: v5e
topology: v5e:2x2
jax: 0.10.0
libtpu: 0.0.40
codegen_flags: <defaults>
</compile_context>

<pallas_src>
import jax
import jax.numpy as jnp
from jax.experimental import pallas as pl
from jax.experimental.pallas import tpu as pltpu


def discriminator_kernel(x_ref, w12_ref, b12_ref, w3_ref, b3_ref, o_ref):
    w12 = w12_ref[...]
    # Cast x to the MXU dtype in-kernel (VPU op hidden under the matmul) so
    # the wrapper never materializes a casted copy of x in HBM.
    x = x_ref[...].astype(w12.dtype)

    # fc1 folded into fc2 (no nonlinearity between them in the reference):
    #   h2 = x @ (W1 @ W2) + (b1 @ W2 + b2)        -- MXU, f32 accumulation.
    h2 = jnp.dot(x, w12, preferred_element_type=jnp.float32) + b12_ref[...]

    # leaky_relu(negative_slope=0.2) as a single vmax per element.
    h2 = jnp.maximum(h2, 0.2 * h2)

    # fc3: output width is 1 -> keep it off the MXU.  VPU multiply against
    # the f32 [1, H] weight row + lane reduction.
    w3 = w3_ref[...]                                      # [1, H], f32
    h3_col = jnp.sum(h2 * w3, axis=-1, keepdims=True)     # [tb, 1]

    # Lane-dense output: transpose the [tb,1] column into a [1,tb] row (XLU,
    # otherwise idle) so the store is a full unmasked vst.
    h3_row = jnp.transpose(h3_col) + b3_ref[...]          # [1, tb]

    # Exact sigmoid (the row is tiny; exact divide is free and matches
    # torch.sigmoid, avoiding the approximate-reciprocal mismatch).
    o_ref[...] = (1.0 / (1.0 + jnp.exp(-h3_row))).astype(o_ref.dtype)


def init_params(key, input_size, hidden_size):
    """nn.Linear-style U(-1/sqrt(fan_in), 1/sqrt(fan_in)) init.
    Weights stored pre-transposed as [in, out]; fc3 weight as a [1, hidden] row."""
    ks = jax.random.split(key, 6)

    def lin(kw, kb, fan_in, fan_out):
        bound = 1.0 / float(fan_in) ** 0.5
        w = jax.random.uniform(kw, (fan_in, fan_out), jnp.float32, -bound, bound)
        b = jax.random.uniform(kb, (1, fan_out), jnp.float32, -bound, bound)
        return w, b

    w1, b1 = lin(ks[0], ks[1], input_size, hidden_size)
    w2, b2 = lin(ks[2], ks[3], hidden_size, hidden_size)
    w3, b3 = lin(ks[4], ks[5], hidden_size, 1)
    return (w1, b1, w2, b2, w3.T, b3)          # w3 kept as a [1, hidden] row


def prepare_params(params, compute_dtype=jnp.bfloat16):
    """One-time (cacheable) param prep, outside the per-call path:
    fold fc1 into fc2 (valid: no activation between them) and pre-cast the MXU
    weight.  Only the MXU operand goes to compute_dtype; the fc3 row and all
    biases stay f32 (fc3 runs on the VPU; bias adds are f32)."""
    w1, b1, w2, b2, w3_row, b3 = (p.astype(jnp.float32) for p in params)
    w12 = w1 @ w2                               # [in, hidden]
    b12 = b1 @ w2 + b2                          # [1, hidden]
    return (w12.astype(compute_dtype), b12, w3_row, b3)


def discriminator_forward(x, prepared_params, *, block_rows=512):
    """x: [B, input_size] f32 -> [B, 1] f32 probabilities."""
    w12, b12, w3_row, b3 = prepared_params
    B, in_f = x.shape
    hidden = w12.shape[1]

    # Batch tile: whole batch, or a multiple of 8 (sublane granularity).
    tb = min(block_rows, B)
    if tb != B and tb % 8:
        tb = max(8, (tb // 8) * 8)
    # v7x megacore: force >= 2 grid steps for large batches so both
    # TensorCores get work (also halves per-step VMEM on the 64 MiB/TC part).
    if tb == B and B >= 512:
        tb = max(8, (B // 2 // 8) * 8)
    num_tiles = pl.cdiv(B, tb)

    # Explicit VMEM budget: double-buffered x tile + resident weights/biases
    # (default double-buffering) + output rows + h2 intermediate + headroom.
    w_bytes = jnp.dtype(w12.dtype).itemsize
    vmem_bytes = (
        2 * tb * in_f * 4
        + 2 * tb * 4
        + 2 * (in_f * hidden * w_bytes + hidden * 4 + hidden * 4 + 4)
        + tb * hidden * 4
        + (2 << 20)
    )
    vmem_limit = int(min(max(vmem_bytes, 4 << 20), 64 << 20))

    def const2d(i):
        # Same block every grid step -> DMA'd once, stays VMEM-resident.
        return (0, 0)

    out3d = pl.pallas_call(
        discriminator_kernel,
        out_shape=jax.ShapeDtypeStruct((num_tiles, 1, tb), jnp.float32),
        grid=(num_tiles,),
        in_specs=[
            pl.BlockSpec((tb, in_f), lambda i: (i, 0)),   # x: tiled over batch
            pl.BlockSpec(w12.shape, const2d),             # folded W12 (bf16/f32)
            pl.BlockSpec(b12.shape, const2d),             # folded bias (f32)
            pl.BlockSpec(w3_row.shape, const2d),          # fc3 row (f32)
            pl.BlockSpec(b3.shape, const2d),              # fc3 bias (f32)
        ],
        # Lane-dense [1, tb] row per step; leading tile dim squeezed out.
        out_specs=pl.BlockSpec((None, 1, tb), lambda i: (i, 0, 0)),
        compiler_params=pltpu.CompilerParams(
            dimension_semantics=("parallel",),
            vmem_limit_bytes=vmem_limit,
        ),
    )(x, w12, b12, w3_row, b3)

    # (num_tiles, 1, tb) -> (B, 1); drops padded lanes of a ragged last tile.
    return out3d.reshape(num_tiles * tb)[:B].reshape(B, 1)


def reference_forward(x, params):
    """Plain-JAX reference matching the PyTorch semantics (unfolded)."""
    w1, b1, w2, b2, w3_row, b3 = params
    h1 = x @ w1 + b1
    h2 = h1 @ w2 + b2
    h2 = jnp.where(h2 >= 0, h2, 0.2 * h2)
    h3 = h2 @ w3_row.T + b3
    return jax.nn.sigmoid(h3)


if __name__ == "__main__":
    input_size = 16
    hidden_size = 32
    batch = 64

    key = jax.random.PRNGKey(0)
    kx, kp = jax.random.split(key)
    x = jax.random.normal(kx, (batch, input_size), dtype=jnp.float32)
    params = init_params(kp, input_size, hidden_size)

    ref = reference_forward(x, params)

    # f32 MXU path, tiled over batch (exercises grid + lane-dense output path).
    prep_f32 = prepare_params(params, compute_dtype=jnp.float32)
    out_f32 = jax.block_until_ready(
        discriminator_forward(x, prep_f32, block_rows=32))
    assert out_f32.shape == (batch, 1)
    assert jnp.allclose(out_f32, ref, atol=1e-4, rtol=1e-4), "f32 mismatch vs reference"

    # Default bf16 MXU path (f32 accumulation + f32 elementwise), single tile.
    prep_bf16 = prepare_params(params)           # bf16 MXU weight by default
    out_bf16 = jax.block_until_ready(discriminator_forward(x, prep_bf16))
    assert out_bf16.shape == (batch, 1)
    assert jnp.allclose(out_bf16, ref, atol=3e-2, rtol=3e-2), "bf16 mismatch vs reference"

    print("KERNEL_OK")
</pallas_src>

<mosaic_0001>
module attributes {stable_mosaic.version = 11 : i64} {
  func.func @discriminator_kernel(%arg0: i32, %arg1: memref<32x16xf32, #tpu.memory_space<vmem>>, %arg2: memref<16x32xf32, #tpu.memory_space<vmem>>, %arg3: memref<1x32xf32, #tpu.memory_space<vmem>>, %arg4: memref<1x32xf32, #tpu.memory_space<vmem>>, %arg5: memref<1x1xf32, #tpu.memory_space<vmem>>, %arg6: memref<1x1x32xf32, #tpu.memory_space<vmem>>) attributes {dimension_semantics = [#tpu.dimension_semantics<parallel>], iteration_bounds = array<i64: 2>, scalar_prefetch = 0 : i64, scratch_operands = 0 : i64, tpu.core_type = #tpu.core_type<tc>, window_params = [{transform_indices = @transform_0, window_bounds = array<i64: 32, 16>}, {pipeline_mode = #tpu.pipeline_mode<synchronous>, transform_indices = @transform_1, window_bounds = array<i64: 16, 32>}, {pipeline_mode = #tpu.pipeline_mode<synchronous>, transform_indices = @transform_2, window_bounds = array<i64: 1, 32>}, {pipeline_mode = #tpu.pipeline_mode<synchronous>, transform_indices = @transform_3, window_bounds = array<i64: 1, 32>}, {pipeline_mode = #tpu.pipeline_mode<synchronous>, transform_indices = @transform_4, window_bounds = array<i64: 1, 1>}, {transform_indices = @transform_5, window_bounds = array<i64: 1, 1, 32>}]} {
    %c0 = arith.constant 0 : index
    %c0_0 = arith.constant 0 : index
    %0 = vector.load %arg2[%c0, %c0_0] : memref<16x32xf32, #tpu.memory_space<vmem>>, vector<16x32xf32>
    %c0_1 = arith.constant 0 : index
    %c0_2 = arith.constant 0 : index
    %1 = vector.load %arg1[%c0_1, %c0_2] : memref<32x16xf32, #tpu.memory_space<vmem>>, vector<32x16xf32>
    %cst = arith.constant dense<0.000000e+00> : vector<32x32xf32>
    %2 = tpu.matmul %1, %0, %cst {dimension_numbers = #tpu.dot_dimension_numbers<[1], [0], [0], [1], [0, 0, 1, 1], [], []>} : vector<32x16xf32>, vector<16x32xf32>, vector<32x32xf32> -> vector<32x32xf32>
    %c0_3 = arith.constant 0 : index
    %c0_4 = arith.constant 0 : index
    %3 = vector.load %arg3[%c0_3, %c0_4] : memref<1x32xf32, #tpu.memory_space<vmem>>, vector<1x32xf32>
    %4 = vector.broadcast %3 : vector<1x32xf32> to vector<32x32xf32>
    %5 = arith.addf %2, %4 : vector<32x32xf32>
    %cst_5 = arith.constant 2.000000e-01 : f32
    %6 = vector.broadcast %cst_5 : f32 to vector<32x32xf32>
    %7 = arith.mulf %6, %5 : vector<32x32xf32>
    %8 = arith.maximumf %5, %7 : vector<32x32xf32>
    %c0_6 = arith.constant 0 : index
    %c0_7 = arith.constant 0 : index
    %9 = vector.load %arg4[%c0_6, %c0_7] : memref<1x32xf32, #tpu.memory_space<vmem>>, vector<1x32xf32>
    %10 = vector.broadcast %9 : vector<1x32xf32> to vector<32x32xf32>
    %11 = arith.mulf %8, %10 : vector<32x32xf32>
    %cst_8 = arith.constant dense<0.000000e+00> : vector<32xf32>
    %12 = vector.multi_reduction <add>, %11, %cst_8 [1] : vector<32x32xf32> to vector<32xf32>
    %13 = vector.shape_cast %12 : vector<32xf32> to vector<32x1xf32>
    %14 = tpu.transpose %13, [1, 0] : vector<32x1xf32> -> vector<1x32xf32>
    %c0_9 = arith.constant 0 : index
    %c0_10 = arith.constant 0 : index
    %15 = vector.load %arg5[%c0_9, %c0_10] : memref<1x1xf32, #tpu.memory_space<vmem>>, vector<1x1xf32>
    %16 = vector.broadcast %15 : vector<1x1xf32> to vector<1x32xf32>
    %17 = arith.addf %14, %16 : vector<1x32xf32>
    %cst_11 = arith.constant 0.000000e+00 : f32
    %18 = vector.broadcast %cst_11 : f32 to vector<1x32xf32>
    %19 = arith.subf %18, %17 : vector<1x32xf32>
    %20 = math.exp %19 : vector<1x32xf32>
    %cst_12 = arith.constant 1.000000e+00 : f32
    %21 = vector.broadcast %cst_12 : f32 to vector<1x32xf32>
    %22 = arith.addf %21, %20 : vector<1x32xf32>
    %cst_13 = arith.constant 1.000000e+00 : f32
    %23 = vector.broadcast %cst_13 : f32 to vector<1x32xf32>
    %24 = arith.divf %23, %22 : vector<1x32xf32>
    %c0_14 = arith.constant 0 : index
    %c0_15 = arith.constant 0 : index
    %c0_16 = arith.constant 0 : index
    %25 = vector.load %arg6[%c0_14, %c0_15, %c0_16] : memref<1x1x32xf32, #tpu.memory_space<vmem>>, vector<1x1x32xf32>
    %26 = vector.shape_cast %25 : vector<1x1x32xf32> to vector<1x32xf32>
    %27 = vector.shape_cast %24 : vector<1x32xf32> to vector<1x1x32xf32>
    tpu.vector_store %arg6[%c0_14, %c0_15, %c0_16], %27 {strides = array<i32>} : memref<1x1x32xf32, #tpu.memory_space<vmem>>, vector<1x1x32xf32>,
    return
  }
  func.func @transform_0(%arg0: i32) -> (i32, i32) {
    %c0_i32 = arith.constant 0 : i32
    %c0_i32_0 = arith.constant 0 : i32
    return %arg0, %c0_i32 : i32, i32
  }
  func.func @transform_1(%arg0: i32) -> (i32, i32) {
    %c0_i32 = arith.constant 0 : i32
    %c0_i32_0 = arith.constant 0 : i32
    %c0_i32_1 = arith.constant 0 : i32
    return %c0_i32, %c0_i32_0 : i32, i32
  }
  func.func @transform_2(%arg0: i32) -> (i32, i32) {
    %c0_i32 = arith.constant 0 : i32
    %c0_i32_0 = arith.constant 0 : i32
    %c0_i32_1 = arith.constant 0 : i32
    return %c0_i32, %c0_i32_0 : i32, i32
  }
  func.func @transform_3(%arg0: i32) -> (i32, i32) {
    %c0_i32 = arith.constant 0 : i32
    %c0_i32_0 = arith.constant 0 : i32
    %c0_i32_1 = arith.constant 0 : i32
    return %c0_i32, %c0_i32_0 : i32, i32
  }
  func.func @transform_4(%arg0: i32) -> (i32, i32) {
    %c0_i32 = arith.constant 0 : i32
    %c0_i32_0 = arith.constant 0 : i32
    %c0_i32_1 = arith.constant 0 : i32
    return %c0_i32, %c0_i32_0 : i32, i32
  }
  func.func @transform_5(%arg0: i32) -> (i32, i32, i32) {
    %c0_i32 = arith.constant 0 : i32
    %c0_i32_0 = arith.constant 0 : i32
    %c0_i32_1 = arith.constant 0 : i32
    return %arg0, %c0_i32, %c0_i32_0 : i32, i32, i32
  }
}

</mosaic_0001>

<llo_original>
// kernel: tpu_custom_call.1
$region0: #{tpu_custom_call.1}
  #allocation0 [shape = 'u32[]', space=smem, size = 0x4, offset = 0x4, fixed_abs, tag = 'smem constant byte address 0x4 - core index']
  #allocation1 [shape = 'u32[72,128]{1,0:T(1,128)}', space=vmem, size = 0x9000, scoped, tag = 'internal scratch']
  #allocation2 [shape = 'f32[1,1]{1,0:T(1,128)S(1)}', space=vmem, size = 0x200, scoped, tag = 'scoped memory for tpu_custom_call.1']
  %s0 = inlined_call_operand.vmem [shape: f32[64,16], index: 0, kind: input, shape index: {}]
  %s1 = inlined_call_operand.vmem [shape: f32[16,32], index: 1, kind: input, shape index: {}]
  %s2 = inlined_call_operand.vmem [shape: f32[1,32], index: 2, kind: input, shape index: {}]
  %s3 = inlined_call_operand.vmem [shape: f32[1,32], index: 3, kind: input, shape index: {}]
  %s4 = inlined_call_operand.<no memory space> [shape: f32[1,1], index: 4, kind: input, shape index: {}]
  %s5 = inlined_call_operand.hbm [shape: f32[2,1,32], index: 5, kind: output, shape index: {}]
  %s6 = sld [smem:[#allocation0]]
  $region53: #{tpu_custom_call.1} parent=0
    _
  %s8 = ssub.s32 1, %s6
  %s9 = scalar_select 0, %s8, %s6
  %v10 = vstv %s4
  %11 = vst [vmem:[#allocation2] sm:$0x1] %v10
  $region1: #{tpu_custom_call.1} parent=0
    #allocation3 [shape = 'u8[1024]{0}', space=vmem, size = 0x400, scoped, tag = 'output window, operand 0']
    #allocation4 [shape = 's32[2]{0}', space=sflag, size = 0x8, scoped, tag = 'scoped memory for tpu_custom_call.1']
    %12 = vsyncpa [#allocation4], 0
    %s13 = scalar_lea.sflag [#allocation4], 1
    %14 = vsyncpa %s13, 0
    loop: start=0, step=1, limit=4
    $region2: #{tpu_custom_call.1} parent=1 // loop_pre_header
      _
    $region3: #{tpu_custom_call.1} parent=1 // loop_header
      %s16 = sphi 0, %s20
      %p17 = scmp.ge.s32.totalorder %s16, 4
      %s26 = sphi 0, %s28
      %s29 = sphi 0, %s26
      %s30 = sphi 0, %s29
      %s46 = sphi 0, %s30
      %s50 = sphi 0, %s50
      %s52 = sphi 0, %s50
      %s53 = sphi 0, %s52
      %s67 = sphi 0, %s53
      %s71 = sphi 0, %s71
      %s73 = sphi 0, %s71
      %s74 = sphi 0, %s73
      %s88 = sphi 0, %s74
      %s92 = sphi 0, %s92
      %s94 = sphi 0, %s92
      %s95 = sphi 0, %s94
      %s109 = sphi 0, %s95
      %s113 = sphi 0, %s113
      %s115 = sphi 0, %s113
      %s116 = sphi 0, %s115
      %s130 = sphi 0, %s116
      %s136 = sphi 0, %s138
      %s139 = sphi 0, %s136
      %s140 = sphi 0, %s139
      %s156 = sphi 0, %s140
    $region4: #{tpu_custom_call.1} parent=1 // loop_header_branch
      %19 = sbr.rel (%p17) target = $region8
    $region5: #{tpu_custom_call.1} parent=1 // loop_body
      %s21 = ssub.s32 %s16, 1
      %s22 = ssub.s32 %s16, 2
      %s23 = sadd.s32 %s16, 1
      %s24 = ssub.s32 %s16, %s23
      %p25 = scmp.eq.s32.totalorder %s24, 0
      %s27 = sadd.s32 %s26, 1
      %s28 = scalar_select %p25, %s26, %s27
      %p31 = pneg %p25
      %p32 = scmp.eq.s32.totalorder %s16, 1
      %p33 = por %p31, %p32
      %p34 = scmp.ne.s32.totalorder %s26, %s29
      %p35 = scmp.eq.s32.totalorder %s16, 0
      %p36 = por %p34, %p35
      %p37 = scmp.ne.s32.totalorder %s26, %s29
      %p38 = scmp.eq.s32.totalorder %s21, 1
      %p39 = por %p37, %p38
      %p40 = scmp.ne.s32.totalorder %s29, %s30
      %p41 = scmp.eq.s32.totalorder %s21, 0
      %p42 = por %p40, %p41
      %p43 = scmp.ne.s32.totalorder %s29, %s30
      %p44 = scmp.eq.s32.totalorder %s22, 1
      %p45 = por %p43, %p44
      %p47 = scmp.ne.s32.totalorder %s30, %s46
      %p48 = scmp.eq.s32.totalorder %s22, 0
      %p49 = por %p47, %p48
      %s51 = sadd.s32 %s50, 1
      %p54 = scmp.eq.s32.totalorder %s16, 1
      %p55 = scmp.ne.s32.totalorder %s50, %s52
      %p56 = scmp.eq.s32.totalorder %s16, 0
      %p57 = por %p55, %p56
      %p58 = scmp.ne.s32.totalorder %s50, %s52
      %p59 = scmp.eq.s32.totalorder %s21, 1
      %p60 = por %p58, %p59
      %p61 = scmp.ne.s32.totalorder %s52, %s53
      %p62 = scmp.eq.s32.totalorder %s21, 0
      %p63 = por %p61, %p62
      %p64 = scmp.ne.s32.totalorder %s52, %s53
      %p65 = scmp.eq.s32.totalorder %s22, 1
      %p66 = por %p64, %p65
      %p68 = scmp.ne.s32.totalorder %s53, %s67
      %p69 = scmp.eq.s32.totalorder %s22, 0
      %p70 = por %p68, %p69
      %s72 = sadd.s32 %s71, 1
      %p75 = scmp.eq.s32.totalorder %s16, 1
      %p76 = scmp.ne.s32.totalorder %s71, %s73
      %p77 = scmp.eq.s32.totalorder %s16, 0
      %p78 = por %p76, %p77
      %p79 = scmp.ne.s32.totalorder %s71, %s73
      %p80 = scmp.eq.s32.totalorder %s21, 1
      %p81 = por %p79, %p80
      %p82 = scmp.ne.s32.totalorder %s73, %s74
      %p83 = scmp.eq.s32.totalorder %s21, 0
      %p84 = por %p82, %p83
      %p85 = scmp.ne.s32.totalorder %s73, %s74
      %p86 = scmp.eq.s32.totalorder %s22, 1
      %p87 = por %p85, %p86
      %p89 = scmp.ne.s32.totalorder %s74, %s88
      %p90 = scmp.eq.s32.totalorder %s22, 0
      %p91 = por %p89, %p90
      %s93 = sadd.s32 %s92, 1
      %p96 = scmp.eq.s32.totalorder %s16, 1
      %p97 = scmp.ne.s32.totalorder %s92, %s94
      %p98 = scmp.eq.s32.totalorder %s16, 0
      %p99 = por %p97, %p98
      %p100 = scmp.ne.s32.totalorder %s92, %s94
      %p101 = scmp.eq.s32.totalorder %s21, 1
      %p102 = por %p100, %p101
      %p103 = scmp.ne.s32.totalorder %s94, %s95
      %p104 = scmp.eq.s32.totalorder %s21, 0
      %p105 = por %p103, %p104
      %p106 = scmp.ne.s32.totalorder %s94, %s95
      %p107 = scmp.eq.s32.totalorder %s22, 1
      %p108 = por %p106, %p107
      %p110 = scmp.ne.s32.totalorder %s95, %s109
      %p111 = scmp.eq.s32.totalorder %s22, 0
      %p112 = por %p110, %p111
      %s114 = sadd.s32 %s113, 1
      %p117 = scmp.eq.s32.totalorder %s16, 1
      %p118 = scmp.ne.s32.totalorder %s113, %s115
      %p119 = scmp.eq.s32.totalorder %s16, 0
      %p120 = por %p118, %p119
      %p121 = scmp.ne.s32.totalorder %s113, %s115
      %p122 = scmp.eq.s32.totalorder %s21, 1
      %p123 = por %p121, %p122
      %p124 = scmp.ne.s32.totalorder %s115, %s116
      %p125 = scmp.eq.s32.totalorder %s21, 0
      %p126 = por %p124, %p125
      %p127 = scmp.ne.s32.totalorder %s115, %s116
      %p128 = scmp.eq.s32.totalorder %s22, 1
      %p129 = por %p127, %p128
      %p131 = scmp.ne.s32.totalorder %s116, %s130
      %p132 = scmp.eq.s32.totalorder %s22, 0
      %p133 = por %p131, %p132
      %s134 = ssub.s32 %s16, %s23
      %p135 = scmp.eq.s32.totalorder %s134, 0
      %s137 = sadd.s32 %s136, 1
      %s138 = scalar_select %p135, %s136, %s137
      %p141 = pneg %p135
      %p142 = scmp.eq.s32.totalorder %s16, 1
      %p143 = por %p141, %p142
      %p144 = scmp.ne.s32.totalorder %s136, %s139
      %p145 = scmp.eq.s32.totalorder %s16, 0
      %p146 = por %p144, %p145
      %p147 = scmp.ne.s32.totalorder %s136, %s139
      %p148 = scmp.eq.s32.totalorder %s21, 1
      %p149 = por %p147, %p148
      %p150 = scmp.ne.s32.totalorder %s139, %s140
      %p151 = scmp.eq.s32.totalorder %s21, 0
      %p152 = por %p150, %p151
      %p153 = scmp.ne.s32.totalorder %s139, %s140
      %p154 = scmp.eq.s32.totalorder %s22, 1
      %p155 = por %p153, %p154
      %p157 = scmp.ne.s32.totalorder %s140, %s156
      %p158 = scmp.eq.s32.totalorder %s22, 0
      %p159 = por %p157, %p158
      %p160 = scmp.le.s32.totalorder 1, %s16
      %p161 = scmp.lt.s32.totalorder %s16, 3
      %p162 = pnand %p160, %p161
      %p163 = pneg %p162
      // Predicated region
      $region9: #{tpu_custom_call.1} parent=5 // pred_check
        _
      $region10: #{tpu_custom_call.1} parent=5 // pred_check_branch
        %165 = sbr.rel (%p162) target = $region12
      $region11: #{tpu_custom_call.1} parent=5 // pred_region
        %s166 = ssub.s32 %s16, 1
        // Predicated region
        $region13: #{tpu_custom_call.1} parent=11 // pred_check
          %p167 = pneg %p63
        $region14: #{tpu_custom_call.1} parent=11 // pred_check_branch
          %169 = sbr.rel (%p167) target = $region16
        $region15: #{tpu_custom_call.1} parent=11 // pred_region
          _
        $region16: #{tpu_custom_call.1} parent=11 // pred_fallthru
          _
        // Predicated region
        $region17: #{tpu_custom_call.1} parent=11 // pred_check
          %p170 = pneg %p84
        $region18: #{tpu_custom_call.1} parent=11 // pred_check_branch
          %172 = sbr.rel (%p170) target = $region20
        $region19: #{tpu_custom_call.1} parent=11 // pred_region
          _
        $region20: #{tpu_custom_call.1} parent=11 // pred_fallthru
          _
        // Predicated region
        $region21: #{tpu_custom_call.1} parent=11 // pred_check
          %p173 = pneg %p105
        $region22: #{tpu_custom_call.1} parent=11 // pred_check_branch
          %175 = sbr.rel (%p173) target = $region24
        $region23: #{tpu_custom_call.1} parent=11 // pred_region
          _
        $region24: #{tpu_custom_call.1} parent=11 // pred_fallthru
          _
        // Predicated region
        $region25: #{tpu_custom_call.1} parent=11 // pred_check
          %p176 = pneg %p126
        $region26: #{tpu_custom_call.1} parent=11 // pred_check_branch
          %178 = sbr.rel (%p176) target = $region28
        $region27: #{tpu_custom_call.1} parent=11 // pred_region
          _
        $region28: #{tpu_custom_call.1} parent=11 // pred_fallthru
          _
      $region12: #{tpu_custom_call.1} parent=5 // pred_fallthru
        _
      %p179 = scmp.lt.s32.totalorder %s16, 2
      // Predicated region
      $region29: #{tpu_custom_call.1} parent=5 // pred_check
        %p180 = pneg %p179
      $region30: #{tpu_custom_call.1} parent=5 // pred_check_branch
        %182 = sbr.rel (%p180) target = $region32
      $region31: #{tpu_custom_call.1} parent=5 // pred_region
        // Predicated region
        $region33: #{tpu_custom_call.1} parent=31 // pred_check
          %p183 = pneg %p36
        $region34: #{tpu_custom_call.1} parent=31 // pred_check_branch
          %185 = sbr.rel (%p183) target = $region36
        $region35: #{tpu_custom_call.1} parent=31 // pred_region
          %s186 = smul.u32 4, %s16
          %p187 = scmp.lt.s32.totalorder %s186, 7
          %s188 = scalar_select %p187, %s186, 7
          %s189 = smul.addr %s188, 8
          %s190 = scalar_lea.vmem %s0, %s189
          %s191 = smul.u32 4, %s16
        $region36: #{tpu_custom_call.1} parent=31 // pred_fallthru
          _
      $region32: #{tpu_custom_call.1} parent=5 // pred_fallthru
        _
      %p192 = scmp.le.s32.totalorder 1, %s16
      %p193 = scmp.lt.s32.totalorder %s16, 3
      %p194 = pnand %p192, %p193
      %p195 = pneg %p194
      // Predicated region
      $region37: #{tpu_custom_call.1} parent=5 // pred_check
        _
      $region38: #{tpu_custom_call.1} parent=5 // pred_check_branch
        %197 = sbr.rel (%p194) target = $region40
      $region39: #{tpu_custom_call.1} parent=5 // pred_region
        %s198 = ssub.s32 %s16, 1
        %s199 = smul.u32 4, %s21
        %p200 = scmp.lt.s32.totalorder %s199, 7
        %s201 = scalar_select %p200, %s199, 7
        %s202 = smul.addr %s201, 8
        %s203 = scalar_lea.vmem %s0, %s202
        %p204 = pneg %p42
        %p205 = pneg %p39
        %p206 = pneg %p63
        %p207 = pneg %p60
        %p208 = pneg %p84
        %p209 = pneg %p81
        %p210 = pneg %p105
        %p211 = pneg %p102
        %p212 = pneg %p126
        %p213 = pneg %p123
        %p214 = pneg %p152
        %p215 = pneg %p149
        %s216 = sand.u32 %s139, 1
        %s217 = scalar_lea.sflag [#allocation4], %s216
        %s218 = sand.u32 %s139, 1
        %s219 = scalar_lea.vmem [#allocation3], %s218
        %s220 = smul.u32 4, %s21
        %p221 = scmp.lt.s32.totalorder %s220, 7
        %s222 = scalar_select %p221, %s220, 7
        %s223 = smul.addr %s222, 8
        %s224 = scalar_lea.vmem %s0, %s223
        %s225 = smul.u32 4, %s21
        %v226 = vld [vmem:[%s1] sm:$0xff]
        %v227 = vld [vmem:[%s1 + $0x8] sm:$0xff]
        %v228 = vld [vmem:[%s224] sm:$0xff]
        %v229 = vld [vmem:[%s224 + $0x8] sm:$0xff]
        %v230 = vld [vmem:[%s224 + $0x10] sm:$0xff]
        %v231 = vld [vmem:[%s224 + $0x18] sm:$0xff]
        %v232 = vld [vmem:[%s2] sm:$0x1]
        %v234 = vperm.slane %v232, 0
        %vm236 = vcmask 130048
        %v238 = vsel %vm236, %v228, 0
        %v241 = vsel %vm236, %v229, 0
        %v244 = vsel %vm236, %v230, 0
        %v247 = vsel %vm236, %v231, 0
        %249 = vmatpush.msra.mxu0 0.0
        %250 = vmatpush.msra.mxu0 0.0
        %251 = vmatpush.msra.mxu0 0.0
        %252 = vmatpush.msra.mxu0 0.0
        %253 = vmatpush.msra.mxu0 0.0
        %254 = vmatpush.msra.mxu0 0.0
        %255 = vmatpush.msra.mxu0 0.0
        %256 = vmatpush.msra.mxu0 0.0
        %257 = vmatpush.msra.mxu0 0.0
        %258 = vmatpush.msra.mxu0 0.0
        %259 = vmatpush.msra.mxu0 0.0
        %260 = vmatpush.msra.mxu0 0.0
        %261 = vmatpush.msra.mxu0 0.0
        %262 = vmatpush.msra.mxu0 0.0
        %263 = vmatpush.msra.mxu0 %v227
        %264 = vmatpush.msra.mxu0 %v226
        %265 = vmatmul.f32.gmra.mxu0 %v238
        %v266 = vpop.f32.mrf.mxu0
        %v267 = vadd.f32 %v234, %v266
        %268 = vmatmul.f32.gmra.mxu0 %v241
        %v269 = vpop.f32.mrf.mxu0
        %v270 = vadd.f32 %v234, %v269
        %271 = vmatmul.f32.gmra.mxu0 %v244
        %v272 = vpop.f32.mrf.mxu0
        %v273 = vadd.f32 %v234, %v272
        %274 = vmatmul.f32.gmra.mxu0 %v247
        %v275 = vpop.f32.mrf.mxu0
        %v276 = vadd.f32 %v234, %v275
        %277 = vdwg.mxu0
        %v278 = vmul.f32 %v267, 0.2
        %v279 = vmul.f32 %v270, 0.2
        %v280 = vmul.f32 %v273, 0.2
        %v281 = vmul.f32 %v276, 0.2
        %v282 = vmax.f32 %v267, %v278
        %v283 = vmax.f32 %v270, %v279
        %v284 = vmax.f32 %v273, %v280
        %v285 = vmax.f32 %v276, %v281
        %v286 = vld [vmem:[%s3] sm:$0x1]
        %v288 = vperm.slane %v286, 0
        %v290 = vmul.f32 %v282, %v288
        %v291 = vmul.f32 %v283, %v288
        %v292 = vmul.f32 %v284, %v288
        %v293 = vmul.f32 %v285, %v288
        %vm294 = vcmask 261120
        %v295 = vsel %vm294, %v290, 0.0
        %296 = vadd.xlane.f32.xlu0 %v295
        %v297 = vpop.xlane.xlu0 %296
        %v298 = vsel %vm294, %v291, 0.0
        %299 = vadd.xlane.f32.xlu0 %v298
        %v300 = vpop.xlane.xlu0 %299
        %v301 = vsel %vm294, %v292, 0.0
        %302 = vadd.xlane.f32.xlu0 %v301
        %v303 = vpop.xlane.xlu0 %302
        %v304 = vsel %vm294, %v293, 0.0
        %305 = vadd.xlane.f32.xlu0 %v304
        %v306 = vpop.xlane.xlu0 %305
        %307 = vxpose.xlu0.b32.start [1/16] %v297, 128
        %308 = vxpose.xlu0.b32.cont [2/16] %v300, 128
        %309 = vxpose.xlu0.b32.cont [3/16] %v303, 128
        %310 = vxpose.xlu0.b32.cont [4/16] %v306, 128
        %311 = vxpose.xlu0.b32.cont [5/16] 0.0, 128
        %312 = vxpose.xlu0.b32.cont [6/16] 0.0, 128
        %313 = vxpose.xlu0.b32.cont [7/16] 0.0, 128
        %314 = vxpose.xlu0.b32.cont [8/16] 0.0, 128
        %315 = vxpose.xlu0.b32.cont [9/16] 0.0, 128
        %316 = vxpose.xlu0.b32.cont [10/16] 0.0, 128
        %317 = vxpose.xlu0.b32.cont [11/16] 0.0, 128
        %318 = vxpose.xlu0.b32.cont [12/16] 0.0, 128
        %319 = vxpose.xlu0.b32.cont [13/16] 0.0, 128
        %320 = vxpose.xlu0.b32.cont [14/16] 0.0, 128
        %321 = vxpose.xlu0.b32.cont [15/16] 0.0, 128
        %322 = vxpose.xlu0.b32.end [16/16] 0.0, 128
        %v323 = vpop.trf.xlu0
        %v324 = vpop.trf.xlu0
        %v325 = vpop.trf.xlu0
        %v326 = vpop.trf.xlu0
        %v327 = vpop.trf.xlu0
        %v328 = vpop.trf.xlu0
        %v329 = vpop.trf.xlu0
        %v330 = vpop.trf.xlu0
        %v331 = vpop.trf.xlu0
        %v332 = vpop.trf.xlu0
        %v333 = vpop.trf.xlu0
        %v334 = vpop.trf.xlu0
        %v335 = vpop.trf.xlu0
        %v336 = vpop.trf.xlu0
        %v337 = vpop.trf.xlu0
        %v338 = vpop.trf.xlu0
        %v339 = vld [vmem:[#allocation2] sm:$0x1]
        %341 = vset.pattern.permute.xlu0 0
        %342 = vperm.xlu0 %341, %v339
        %v343 = vpop.permute.xlu0 %342
        %v345 = vperm.slane %v343, 0
        %v346 = vadd.f32 %v323, %v345
        %v347 = vsub.f32 0.0, %v346
        %v348 = vmul.f32 %v347, 1.442695
        %v349 = vpow.pop %v348
        %v350 = vadd.f32 %v349, 1.0
        %v351 = vrcp.pop %v350
        %v352 = vmul.f32 %v350, %v351
        %v353 = vsub.f32 1.0, %v352
        %v354 = vmul.f32 %v351, %v353
        %v355 = vadd.f32 %v351, %v354
        %vm356 = vweird.f32 %v350
        %vm357 = vweird.f32 %v351
        %vm358 = vmor %vm356, %vm357
        %v359 = vsel %vm358, %v351, %v355
        %v360 = vand.u32 2147483647, %v350
        %vm361 = vcmp.eq.f32.partialorder %v360, 8.507059e+37
        %v362 = vand.u32 %v350, 2147483648
        %v363 = vor.u32 1.1754944e-38, %v362
        %v364 = vsel %vm361, %v363, %v359
        %v365 = vmul.f32 1.0, %v364
        %vm366 = vcmask 253952
        %367 = vst.msk [vmem:[%s219] sm:$0x1] %vm366, %v365
        %s368 = sand.u32 %s139, 1
        %s369 = scalar_lea.sflag [#allocation4], %s368
        %s370 = sand.u32 %s139, 1
        %s371 = scalar_lea.vmem [#allocation3], %s370
        // Predicated region
        $region41: #{tpu_custom_call.1} parent=39 // pred_check
          %p372 = pneg %p149
        $region42: #{tpu_custom_call.1} parent=39 // pred_check_branch
          %374 = sbr.rel (%p372) target = $region44
        $region43: #{tpu_custom_call.1} parent=39 // pred_region
          %376 = vsyncadd %s369, 0
          %s377 = scalar_lea.hbm %s5, %s21
          %s379 = sshll.u32 %s371, 4
          %s380 = int_to_ptr.vmem [resolvable:$true] %s379
          %s381 = sshll.u32 %s377, 4
          %s382 = int_to_ptr.hbm [resolvable:$true] %s381
          %384 = dma.vmem_to_hbm [thread:$0]  %s380, 16, %s382, %s369
        $region44: #{tpu_custom_call.1} parent=39 // pred_fallthru
          _
      $region40: #{tpu_custom_call.1} parent=5 // pred_fallthru
        _
      %p385 = scmp.le.s32.totalorder 2, %s16
      // Predicated region
      $region45: #{tpu_custom_call.1} parent=5 // pred_check
        %p386 = pneg %p385
      $region46: #{tpu_custom_call.1} parent=5 // pred_check_branch
        %388 = sbr.rel (%p386) target = $region48
      $region47: #{tpu_custom_call.1} parent=5 // pred_region
        %s389 = ssub.s32 %s16, 2
        // Predicated region
        $region49: #{tpu_custom_call.1} parent=47 // pred_check
          %p390 = pneg %p155
        $region50: #{tpu_custom_call.1} parent=47 // pred_check_branch
          %392 = sbr.rel (%p390) target = $region52
        $region51: #{tpu_custom_call.1} parent=47 // pred_region
          %s393 = sand.u32 %s140, 1
          %s394 = scalar_lea.sflag [#allocation4], %s393
          %s395 = sand.u32 %s140, 1
          %s396 = scalar_lea.vmem [#allocation3], %s395
          %398 = dma.done %s394, 16
        $region52: #{tpu_custom_call.1} parent=47 // pred_fallthru
          _
      $region48: #{tpu_custom_call.1} parent=5 // pred_fallthru
        _
    $region6: #{tpu_custom_call.1} parent=1 // loop_footer
      %s20 = sadd.s32 1, %s16
    $region7: #{tpu_custom_call.1} parent=1 // loop_footer_branch
      %15 = sbr.rel target = $region3
    $region8: #{tpu_custom_call.1} parent=1 // loop_exit
      _
    %399 = vsyncpa [#allocation4], 1
    %s400 = scalar_lea.sflag [#allocation4], 1
    %401 = vsyncpa %s400, 1

</llo_original>
